<compile_context>
chip_gen: v7x
topology: tpu7x:2x2x1
jax: 0.10.0
libtpu: 0.0.40
codegen_flags: <defaults>
</compile_context>

<pallas_src>
import jax
import jax.numpy as jnp
from jax.experimental import pallas as pl
from jax.experimental.pallas import tpu as pltpu


def _ffn_kernel(x_ref, w1_ref, b1_ref, w2_ref, b2_ref, o_ref):
    # (TR, D) @ (D, F) -> (TR, F) on the MXU, f32 accumulate.
    h = jnp.dot(x_ref[...], w1_ref[...], preferred_element_type=jnp.float32)
    h = h + b1_ref[...].astype(jnp.float32)                  # (1, F) broadcast
    # TODO(synk): PyTorch F.gelu default is the exact erf GELU; the tanh
    # approximation is used here for robust Mosaic lowering (|diff| ~1e-3).
    g = jax.nn.gelu(h, approximate=True)
    # TODO(synk): dropout treated as identity (inference); training-mode dropout
    # would use pltpu.prng_seed / pltpu.stateful_bernoulli.
    out = jnp.dot(g.astype(w2_ref.dtype), w2_ref[...],
                  preferred_element_type=jnp.float32)
    out = out + b2_ref[...].astype(jnp.float32)              # (1, D) broadcast
    o_ref[...] = out.astype(o_ref.dtype)


def _round_up(n, m):
    return ((n + m - 1) // m) * m


def feed_forward_pallas(x, w1, b1, w2, b2, *, row_tile=256):
    """Fused FFN.

    x : (B, S, D)      activations
    w1: (D, F), b1: (F,)   -- linear1 (already transposed vs. torch's (out,in))
    w2: (F, D), b2: (D,)   -- linear2
    Returns (B, S, D).
    """
    B, S, D = x.shape
    d_ff = w1.shape[1]
    rows = B * S
    x2 = x.reshape(rows, D)

    # Sublane granularity: bf16 packs 2 rows per sublane -> keep tiles 16-aligned.
    sub = 16 if x.dtype == jnp.bfloat16 else 8
    tr = max(sub, min(_round_up(row_tile, sub), _round_up(rows, sub)))
    rows_p = _round_up(rows, tr)
    if rows_p != rows:
        # Zero-pad the tail tile (rows are independent; padding is discarded).
        x2 = jnp.pad(x2, ((0, rows_p - rows), (0, 0)))

    grid = (rows_p // tr,)

    # NOTE: for very large d_ff the hidden dimension would get its own grid
    # axis + accumulator; for transformer-sized d_ff (<= ~8K) the resident
    # weights + (TR, d_ff) intermediate comfortably fit the VMEM budget below.
    out = pl.pallas_call(
        _ffn_kernel,
        out_shape=jax.ShapeDtypeStruct((rows_p, D), x.dtype),
        grid_spec=pltpu.PrefetchScalarGridSpec(
            num_scalar_prefetch=0,
            grid=grid,
            in_specs=[
                pl.BlockSpec((tr, D), lambda i: (i, 0)),      # streaming x tile
                pl.BlockSpec((D, d_ff), lambda i: (0, 0)),    # W1 resident
                pl.BlockSpec((1, d_ff), lambda i: (0, 0)),    # b1 resident
                pl.BlockSpec((d_ff, D), lambda i: (0, 0)),    # W2 resident
                pl.BlockSpec((1, D), lambda i: (0, 0)),       # b2 resident
            ],
            out_specs=pl.BlockSpec((tr, D), lambda i: (i, 0)),
        ),
        compiler_params=pltpu.CompilerParams(
            dimension_semantics=("parallel",),        # megacore on v7x
            vmem_limit_bytes=48 * 1024 * 1024,        # fits v7x's 64 MiB VMEM
        ),
    )(x2, w1, b1.reshape(1, d_ff), w2, b2.reshape(1, D))

    return out[:rows].reshape(B, S, D)


if __name__ == "__main__":
    # Small shapes consistent with the module: batch=2, seq=8, d_model=32, d_ff=128.
    B, S, D, d_ff = 2, 8, 32, 128

    key = jax.random.PRNGKey(0)
    k1, k2, k3, k4, k5 = jax.random.split(key, 5)
    x = jax.random.normal(k1, (B, S, D), dtype=jnp.float32)
    # nn.init.normal_(weight, std=0.02); small deterministic biases.
    w1 = 0.02 * jax.random.normal(k2, (D, d_ff), dtype=jnp.float32)
    b1 = 0.02 * jax.random.normal(k3, (d_ff,), dtype=jnp.float32)
    w2 = 0.02 * jax.random.normal(k4, (d_ff, D), dtype=jnp.float32)
    b2 = 0.02 * jax.random.normal(k5, (D,), dtype=jnp.float32)

    out = feed_forward_pallas(x, w1, b1, w2, b2)
    out = jax.block_until_ready(out)

    # Plain-JAX reference (same tanh-GELU, dropout = identity).
    x2 = x.reshape(B * S, D)
    ref = jax.nn.gelu(x2 @ w1 + b1, approximate=True) @ w2 + b2
    ref = ref.reshape(B, S, D)
    assert out.shape == (B, S, D)
    assert jnp.allclose(out, ref, atol=1e-5, rtol=1e-4), "mismatch vs reference"

    print("KERNEL_OK")
</pallas_src>

<mosaic_0001>
module attributes {stable_mosaic.version = 11 : i64} {
  func.func @_ffn_kernel(%arg0: i32, %arg1: memref<16x32xf32, #tpu.memory_space<vmem>>, %arg2: memref<32x128xf32, #tpu.memory_space<vmem>>, %arg3: memref<1x128xf32, #tpu.memory_space<vmem>>, %arg4: memref<128x32xf32, #tpu.memory_space<vmem>>, %arg5: memref<1x32xf32, #tpu.memory_space<vmem>>, %arg6: memref<16x32xf32, #tpu.memory_space<vmem>>) attributes {dimension_semantics = [#tpu.dimension_semantics<parallel>], iteration_bounds = array<i64: 1>, scalar_prefetch = 0 : i64, scratch_operands = 0 : i64, tpu.core_type = #tpu.core_type<tc>, window_params = [{transform_indices = @transform_0, window_bounds = array<i64: 16, 32>}, {pipeline_mode = #tpu.pipeline_mode<synchronous>, transform_indices = @transform_1, window_bounds = array<i64: 32, 128>}, {pipeline_mode = #tpu.pipeline_mode<synchronous>, transform_indices = @transform_2, window_bounds = array<i64: 1, 128>}, {pipeline_mode = #tpu.pipeline_mode<synchronous>, transform_indices = @transform_3, window_bounds = array<i64: 128, 32>}, {pipeline_mode = #tpu.pipeline_mode<synchronous>, transform_indices = @transform_4, window_bounds = array<i64: 1, 32>}, {transform_indices = @transform_5, window_bounds = array<i64: 16, 32>}]} {
    %c0 = arith.constant 0 : index
    %c0_0 = arith.constant 0 : index
    %0 = vector.load %arg1[%c0, %c0_0] : memref<16x32xf32, #tpu.memory_space<vmem>>, vector<16x32xf32>
    %c0_1 = arith.constant 0 : index
    %c0_2 = arith.constant 0 : index
    %1 = vector.load %arg2[%c0_1, %c0_2] : memref<32x128xf32, #tpu.memory_space<vmem>>, vector<32x128xf32>
    %cst = arith.constant dense<0.000000e+00> : vector<16x128xf32>
    %2 = tpu.matmul %0, %1, %cst {dimension_numbers = #tpu.dot_dimension_numbers<[1], [0], [0], [1], [0, 0, 1, 1], [], []>} : vector<16x32xf32>, vector<32x128xf32>, vector<16x128xf32> -> vector<16x128xf32>
    %c0_3 = arith.constant 0 : index
    %c0_4 = arith.constant 0 : index
    %3 = vector.load %arg3[%c0_3, %c0_4] : memref<1x128xf32, #tpu.memory_space<vmem>>, vector<1x128xf32>
    %4 = vector.broadcast %3 : vector<1x128xf32> to vector<16x128xf32>
    %5 = arith.addf %2, %4 : vector<16x128xf32>
    %6 = arith.mulf %5, %5 : vector<16x128xf32>
    %7 = arith.mulf %5, %6 : vector<16x128xf32>
    %cst_5 = arith.constant 4.471500e-02 : f32
    %8 = vector.broadcast %cst_5 : f32 to vector<16x128xf32>
    %9 = arith.mulf %8, %7 : vector<16x128xf32>
    %10 = arith.addf %5, %9 : vector<16x128xf32>
    %cst_6 = arith.constant 0.797884583 : f32
    %11 = vector.broadcast %cst_6 : f32 to vector<16x128xf32>
    %12 = arith.mulf %11, %10 : vector<16x128xf32>
    %13 = math.tanh %12 : vector<16x128xf32>
    %cst_7 = arith.constant 1.000000e+00 : f32
    %14 = vector.broadcast %cst_7 : f32 to vector<16x128xf32>
    %15 = arith.addf %14, %13 : vector<16x128xf32>
    %cst_8 = arith.constant 5.000000e-01 : f32
    %16 = vector.broadcast %cst_8 : f32 to vector<16x128xf32>
    %17 = arith.mulf %16, %15 : vector<16x128xf32>
    %18 = arith.mulf %5, %17 : vector<16x128xf32>
    %c0_9 = arith.constant 0 : index
    %c0_10 = arith.constant 0 : index
    %19 = vector.load %arg4[%c0_9, %c0_10] : memref<128x32xf32, #tpu.memory_space<vmem>>, vector<128x32xf32>
    %cst_11 = arith.constant dense<0.000000e+00> : vector<16x32xf32>
    %20 = tpu.matmul %18, %19, %cst_11 {dimension_numbers = #tpu.dot_dimension_numbers<[1], [0], [0], [1], [0, 0, 1, 1], [], []>} : vector<16x128xf32>, vector<128x32xf32>, vector<16x32xf32> -> vector<16x32xf32>
    %c0_12 = arith.constant 0 : index
    %c0_13 = arith.constant 0 : index
    %21 = vector.load %arg5[%c0_12, %c0_13] : memref<1x32xf32, #tpu.memory_space<vmem>>, vector<1x32xf32>
    %22 = vector.broadcast %21 : vector<1x32xf32> to vector<16x32xf32>
    %23 = arith.addf %20, %22 : vector<16x32xf32>
    %c0_14 = arith.constant 0 : index
    %c0_15 = arith.constant 0 : index
    %24 = vector.load %arg6[%c0_14, %c0_15] : memref<16x32xf32, #tpu.memory_space<vmem>>, vector<16x32xf32>
    tpu.vector_store %arg6[%c0_14, %c0_15], %23 {strides = array<i32>} : memref<16x32xf32, #tpu.memory_space<vmem>>, vector<16x32xf32>,
    return
  }
  func.func @transform_0(%arg0: i32) -> (i32, i32) {
    %c0_i32 = arith.constant 0 : i32
    %c0_i32_0 = arith.constant 0 : i32
    return %arg0, %c0_i32 : i32, i32
  }
  func.func @transform_1(%arg0: i32) -> (i32, i32) {
    %c0_i32 = arith.constant 0 : i32
    %c0_i32_0 = arith.constant 0 : i32
    %c0_i32_1 = arith.constant 0 : i32
    return %c0_i32, %c0_i32_0 : i32, i32
  }
  func.func @transform_2(%arg0: i32) -> (i32, i32) {
    %c0_i32 = arith.constant 0 : i32
    %c0_i32_0 = arith.constant 0 : i32
    %c0_i32_1 = arith.constant 0 : i32
    return %c0_i32, %c0_i32_0 : i32, i32
  }
  func.func @transform_3(%arg0: i32) -> (i32, i32) {
    %c0_i32 = arith.constant 0 : i32
    %c0_i32_0 = arith.constant 0 : i32
    %c0_i32_1 = arith.constant 0 : i32
    return %c0_i32, %c0_i32_0 : i32, i32
  }
  func.func @transform_4(%arg0: i32) -> (i32, i32) {
    %c0_i32 = arith.constant 0 : i32
    %c0_i32_0 = arith.constant 0 : i32
    %c0_i32_1 = arith.constant 0 : i32
    return %c0_i32, %c0_i32_0 : i32, i32
  }
  func.func @transform_5(%arg0: i32) -> (i32, i32) {
    %c0_i32 = arith.constant 0 : i32
    %c0_i32_0 = arith.constant 0 : i32
    return %arg0, %c0_i32 : i32, i32
  }
}

</mosaic_0001>

<llo_original>
// kernel: tpu_custom_call.1
$region0: #{tpu_custom_call.1}
  #allocation0 [shape = 'u32[]', space=smem, size = 0x4, offset = 0x4, fixed_abs, tag = 'smem constant byte address 0x4 - core index']
  #allocation1 [shape = 'u32[144,128]{1,0:T(1,128)}', space=vmem, size = 0x12000, scoped, tag = 'internal scratch']
  %s0 = inlined_call_operand.vmem [shape: f32[16,32], index: 0, kind: input, shape index: {}]
  %s1 = inlined_call_operand.vmem [shape: f32[32,128], index: 1, kind: input, shape index: {}]
  %s2 = inlined_call_operand.vmem [shape: f32[1,128], index: 2, kind: input, shape index: {}]
  %s3 = inlined_call_operand.vmem [shape: f32[128,32], index: 3, kind: input, shape index: {}]
  %s4 = inlined_call_operand.vmem [shape: f32[1,32], index: 4, kind: input, shape index: {}]
  %s5 = inlined_call_operand.hbm [shape: f32[16,32], index: 5, kind: output, shape index: {}]
  %s6 = sld [smem:[#allocation0]]
  $region30: #{tpu_custom_call.1} parent=0
    _
  %s8 = ssub.s32 1, %s6
  %s9 = scalar_select 0, %s8, %s6
  $region1: #{tpu_custom_call.1} parent=0
    #allocation2 [shape = 'u8[8192]{0}', space=vmem, size = 0x2000, scoped, tag = 'output window, operand 0, single buffered']
    #allocation3 [shape = 's32[1]{0}', space=sflag, size = 0x4, scoped, tag = 'scoped memory for tpu_custom_call.1']
    %10 = vsyncpa [#allocation3], 0
    // Predicated region
    $region2: #{tpu_custom_call.1} parent=1 // pred_check
      _
    $region3: #{tpu_custom_call.1} parent=1 // pred_check_branch
      %12 = sbr.rel (0) target = $region5
    $region4: #{tpu_custom_call.1} parent=1 // pred_region
      _
    $region5: #{tpu_custom_call.1} parent=1 // pred_fallthru
      _
    // Predicated region
    $region6: #{tpu_custom_call.1} parent=1 // pred_check
      _
    $region7: #{tpu_custom_call.1} parent=1 // pred_check_branch
      %14 = sbr.rel (0) target = $region9
    $region8: #{tpu_custom_call.1} parent=1 // pred_region
      _
    $region9: #{tpu_custom_call.1} parent=1 // pred_fallthru
      _
    // Predicated region
    $region10: #{tpu_custom_call.1} parent=1 // pred_check
      _
    $region11: #{tpu_custom_call.1} parent=1 // pred_check_branch
      %16 = sbr.rel (0) target = $region13
    $region12: #{tpu_custom_call.1} parent=1 // pred_region
      _
    $region13: #{tpu_custom_call.1} parent=1 // pred_fallthru
      _
    // Predicated region
    $region14: #{tpu_custom_call.1} parent=1 // pred_check
      _
    $region15: #{tpu_custom_call.1} parent=1 // pred_check_branch
      %18 = sbr.rel (0) target = $region17
    $region16: #{tpu_custom_call.1} parent=1 // pred_region
      _
    $region17: #{tpu_custom_call.1} parent=1 // pred_fallthru
      _
    // Predicated region
    $region18: #{tpu_custom_call.1} parent=1 // pred_check
      _
    $region19: #{tpu_custom_call.1} parent=1 // pred_check_branch
      %20 = sbr.rel (0) target = $region21
    $region20: #{tpu_custom_call.1} parent=1 // pred_region
      _
    $region21: #{tpu_custom_call.1} parent=1 // pred_fallthru
      _
    %v21 = vld [vmem:[%s0] sm:$0xff]
    %v22 = vld [vmem:[%s0 + $0x8] sm:$0xff]
    %v23 = vld [vmem:[%s1] sm:$0xff]
    %v24 = vld [vmem:[%s1 + $0x8] sm:$0xff]
    %v25 = vld [vmem:[%s1 + $0x10] sm:$0xff]
    %v26 = vld [vmem:[%s1 + $0x18] sm:$0xff]
    %v27 = vld [vmem:[%s2] sm:$0x1]
    %v29 = vlaneseq
    %v30 = vshrl.u32 %v29, 7
    %v31 = vsub.s32 0, %v30
    %v32 = vrot.slane %v27, %v31
    %vm34 = vcmask 261120
    %v36 = vsel %vm34, %v21, 0
    %v39 = vsel %vm34, %v22, 0
    %41 = vmatprep.subr.mxu0 0.0
    %42 = vmatpush1.msra.mxu0 %v23
    %43 = vmatprep.subr.mxu0 0.0
    %44 = vmatpush1.msra.mxu0 %v24
    %45 = vmatprep.subr.mxu0 0.0
    %46 = vmatpush1.msra.mxu0 %v25
    %47 = vmatprep.subr.mxu0 0.0
    %48 = vmatpush1.msra.mxu0 %v26
    %49 = vmatprep.subr.mxu0 0.0
    %50 = vmatpush1.msra.mxu0 0.0
    %51 = vmatprep.subr.mxu0 0.0
    %52 = vmatpush1.msra.mxu0 0.0
    %53 = vmatprep.subr.mxu0 0.0
    %54 = vmatpush1.msra.mxu0 0.0
    %55 = vmatprep.subr.mxu0 0.0
    %56 = vmatpush1.msra.mxu0 0.0
    %57 = vmatprep.subr.mxu0 0.0
    %58 = vmatpush1.msra.mxu0 0.0
    %59 = vmatprep.subr.mxu0 0.0
    %60 = vmatpush1.msra.mxu0 0.0
    %61 = vmatprep.subr.mxu0 0.0
    %62 = vmatpush1.msra.mxu0 0.0
    %63 = vmatprep.subr.mxu0 0.0
    %64 = vmatpush1.msra.mxu0 0.0
    %65 = vmatprep.subr.mxu0 0.0
    %66 = vmatpush1.msra.mxu0 0.0
    %67 = vmatprep.subr.mxu0 0.0
    %68 = vmatpush1.msra.mxu0 0.0
    %69 = vmatprep.subr.mxu0 0.0
    %70 = vmatpush1.msra.mxu0 0.0
    %71 = vmatprep.subr.mxu0 0.0
    %72 = vmatpush1.msra.mxu0 0.0
    %73 = vmatprep.subr.mxu0 0.0
    %74 = vmatpush1.msra.mxu0 0.0
    %75 = vmatprep.subr.mxu0 0.0
    %76 = vmatpush1.msra.mxu0 0.0
    %77 = vmatprep.subr.mxu0 0.0
    %78 = vmatpush1.msra.mxu0 0.0
    %79 = vmatprep.subr.mxu0 0.0
    %80 = vmatpush1.msra.mxu0 0.0
    %81 = vmatprep.subr.mxu0 0.0
    %82 = vmatpush1.msra.mxu0 0.0
    %83 = vmatprep.subr.mxu0 0.0
    %84 = vmatpush1.msra.mxu0 0.0
    %85 = vmatprep.subr.mxu0 0.0
    %86 = vmatpush1.msra.mxu0 0.0
    %87 = vmatprep.subr.mxu0 0.0
    %88 = vmatpush1.msra.mxu0 0.0
    %89 = vmatprep.subr.mxu0 0.0
    %90 = vmatpush1.msra.mxu0 0.0
    %91 = vmatprep.subr.mxu0 0.0
    %92 = vmatpush1.msra.mxu0 0.0
    %93 = vmatprep.subr.mxu0 0.0
    %94 = vmatpush1.msra.mxu0 0.0
    %95 = vmatprep.subr.mxu0 0.0
    %96 = vmatpush1.msra.mxu0 0.0
    %97 = vmatprep.subr.mxu0 0.0
    %98 = vmatpush1.msra.mxu0 0.0
    %99 = vmatprep.subr.mxu0 0.0
    %100 = vmatpush1.msra.mxu0 0.0
    %101 = vmatprep.subr.mxu0 0.0
    %102 = vmatpush1.msra.mxu0 0.0
    %103 = vmatprep.subr.mxu0 0.0
    %104 = vmatpush1.msra.mxu0 0.0
    %105 = vmatprep.mubr.f32.mxu0 0.0
    %106 = vmatmul.mubr.f32.gmra.mrb[0].mxu0 %v36
    %v107 = vpop.f32.mrb[0].mxu0
    %v108 = vadd.f32 %v32, %v107
    %v109 = vpop.f32.mrb[0].mxu0
    %110 = vmatprep.mubr.f32.mxu0 0.0
    %111 = vmatmul.mubr.f32.gmra.mrb[0].mxu0 %v39
    %v112 = vpop.f32.mrb[0].mxu0
    %v113 = vadd.f32 %v32, %v112
    %v114 = vpop.f32.mrb[0].mxu0
    %115 = vdwg.mxu0
    %v116 = vmul.f32 %v108, %v108
    %v117 = vmul.f32 %v113, %v113
    %v118 = vmul.f32 %v108, %v116
    %v119 = vmul.f32 %v113, %v117
    %v120 = vmul.f32 %v118, 0.044715
    %v121 = vmul.f32 %v119, 0.044715
    %v122 = vadd.f32 %v108, %v120
    %v123 = vadd.f32 %v113, %v121
    %v124 = vmul.f32 %v122, 0.7978846
    %v125 = vmul.f32 %v123, 0.7978846
    %v126 = vtanh.pop %v124
    %v127 = vtanh.pop %v125
    %v128 = vadd.f32 %v126, 1.0
    %v129 = vadd.f32 %v127, 1.0
    %v130 = vmul.f32 %v128, 0.5
    %v131 = vmul.f32 %v129, 0.5
    %v132 = vmul.f32 %v108, %v130
    %v133 = vmul.f32 %v113, %v131
    %v134 = vld [vmem:[%s3] sm:$0xff]
    %v135 = vld [vmem:[%s3 + $0x8] sm:$0xff]
    %v136 = vld [vmem:[%s3 + $0x10] sm:$0xff]
    %v137 = vld [vmem:[%s3 + $0x18] sm:$0xff]
    %v138 = vld [vmem:[%s3 + $0x20] sm:$0xff]
    %v139 = vld [vmem:[%s3 + $0x28] sm:$0xff]
    %v140 = vld [vmem:[%s3 + $0x30] sm:$0xff]
    %v141 = vld [vmem:[%s3 + $0x38] sm:$0xff]
    %v142 = vld [vmem:[%s3 + $0x40] sm:$0xff]
    %v143 = vld [vmem:[%s3 + $0x48] sm:$0xff]
    %v144 = vld [vmem:[%s3 + $0x50] sm:$0xff]
    %v145 = vld [vmem:[%s3 + $0x58] sm:$0xff]
    %v146 = vld [vmem:[%s3 + $0x60] sm:$0xff]
    %v147 = vld [vmem:[%s3 + $0x68] sm:$0xff]
    %v148 = vld [vmem:[%s3 + $0x70] sm:$0xff]
    %v149 = vld [vmem:[%s3 + $0x78] sm:$0xff]
    %v150 = vld [vmem:[%s4] sm:$0x1]
    %v152 = vlaneseq
    %v153 = vshrl.u32 %v152, 7
    %v154 = vsub.s32 0, %v153
    %v155 = vrot.slane %v150, %v154
    %157 = vmatprep.subr.mxu0 0.0
    %158 = vmatpush1.msra.mxu0 %v134
    %159 = vmatprep.subr.mxu0 0.0
    %160 = vmatpush1.msra.mxu0 %v135
    %161 = vmatprep.subr.mxu0 0.0
    %162 = vmatpush1.msra.mxu0 %v136
    %163 = vmatprep.subr.mxu0 0.0
    %164 = vmatpush1.msra.mxu0 %v137
    %165 = vmatprep.subr.mxu0 0.0
    %166 = vmatpush1.msra.mxu0 %v138
    %167 = vmatprep.subr.mxu0 0.0
    %168 = vmatpush1.msra.mxu0 %v139
    %169 = vmatprep.subr.mxu0 0.0
    %170 = vmatpush1.msra.mxu0 %v140
    %171 = vmatprep.subr.mxu0 0.0
    %172 = vmatpush1.msra.mxu0 %v141
    %173 = vmatprep.subr.mxu0 0.0
    %174 = vmatpush1.msra.mxu0 %v142
    %175 = vmatprep.subr.mxu0 0.0
    %176 = vmatpush1.msra.mxu0 %v143
    %177 = vmatprep.subr.mxu0 0.0
    %178 = vmatpush1.msra.mxu0 %v144
    %179 = vmatprep.subr.mxu0 0.0
    %180 = vmatpush1.msra.mxu0 %v145
    %181 = vmatprep.subr.mxu0 0.0
    %182 = vmatpush1.msra.mxu0 %v146
    %183 = vmatprep.subr.mxu0 0.0
    %184 = vmatpush1.msra.mxu0 %v147
    %185 = vmatprep.subr.mxu0 0.0
    %186 = vmatpush1.msra.mxu0 %v148
    %187 = vmatprep.subr.mxu0 0.0
    %188 = vmatpush1.msra.mxu0 %v149
    %189 = vmatprep.subr.mxu0 0.0
    %190 = vmatpush1.msra.mxu0 0.0
    %191 = vmatprep.subr.mxu0 0.0
    %192 = vmatpush1.msra.mxu0 0.0
    %193 = vmatprep.subr.mxu0 0.0
    %194 = vmatpush1.msra.mxu0 0.0
    %195 = vmatprep.subr.mxu0 0.0
    %196 = vmatpush1.msra.mxu0 0.0
    %197 = vmatprep.subr.mxu0 0.0
    %198 = vmatpush1.msra.mxu0 0.0
    %199 = vmatprep.subr.mxu0 0.0
    %200 = vmatpush1.msra.mxu0 0.0
    %201 = vmatprep.subr.mxu0 0.0
    %202 = vmatpush1.msra.mxu0 0.0
    %203 = vmatprep.subr.mxu0 0.0
    %204 = vmatpush1.msra.mxu0 0.0
    %205 = vmatprep.subr.mxu0 0.0
    %206 = vmatpush1.msra.mxu0 0.0
    %207 = vmatprep.subr.mxu0 0.0
    %208 = vmatpush1.msra.mxu0 0.0
    %209 = vmatprep.subr.mxu0 0.0
    %210 = vmatpush1.msra.mxu0 0.0
    %211 = vmatprep.subr.mxu0 0.0
    %212 = vmatpush1.msra.mxu0 0.0
    %213 = vmatprep.subr.mxu0 0.0
    %214 = vmatpush1.msra.mxu0 0.0
    %215 = vmatprep.subr.mxu0 0.0
    %216 = vmatpush1.msra.mxu0 0.0
    %217 = vmatprep.subr.mxu0 0.0
    %218 = vmatpush1.msra.mxu0 0.0
    %219 = vmatprep.subr.mxu0 0.0
    %220 = vmatpush1.msra.mxu0 0.0
    %221 = vmatprep.mubr.f32.mxu0 0.0
    %222 = vmatmul.mubr.f32.gmra.mrb[0].mxu0 %v132
    %v223 = vpop.f32.mrb[0].mxu0
    %v224 = vadd.f32 %v155, %v223
    %v225 = vpop.f32.mrb[0].mxu0
    %226 = vmatprep.mubr.f32.mxu0 0.0
    %227 = vmatmul.mubr.f32.gmra.mrb[0].mxu0 %v133
    %v228 = vpop.f32.mrb[0].mxu0
    %v229 = vadd.f32 %v155, %v228
    %v230 = vpop.f32.mrb[0].mxu0
    %231 = vdwg.mxu0
    %232 = vst.msk [vmem:[#allocation2] sm:$0xff] %vm34, %v224
    %233 = vst.msk [vmem:[#allocation2 + $0x8] sm:$0xff] %vm34, %v229
    // Predicated region
    $region22: #{tpu_custom_call.1} parent=1 // pred_check
      _
    $region23: #{tpu_custom_call.1} parent=1 // pred_check_branch
      %235 = sbr.rel (0) target = $region25
    $region24: #{tpu_custom_call.1} parent=1 // pred_region
      %s237 = ssub.s32 256, 256
      %238 = vsyncadd [#allocation3], %s237
      %s239 = sshll.u32 [#allocation2], 4
      %s240 = int_to_ptr.vmem [resolvable:$true] %s239
      %245 = dma.vmem_to_hbm [thread:$0]  %s240, 256, %s5, [#allocation3], 128, 128, 8
    $region25: #{tpu_custom_call.1} parent=1 // pred_fallthru
      _
    // Predicated region
    $region26: #{tpu_custom_call.1} parent=1 // pred_check
      _
    $region27: #{tpu_custom_call.1} parent=1 // pred_check_branch
      %247 = sbr.rel (0) target = $region29
    $region28: #{tpu_custom_call.1} parent=1 // pred_region
      %248 = dma.done [#allocation3], 256
    $region29: #{tpu_custom_call.1} parent=1 // pred_fallthru
      _
    %249 = vsyncpa [#allocation3], 1

</llo_original>
